<compile_context>
chip_gen: v7x
topology: tpu7x:2x2x1
jax: 0.10.0
libtpu: 0.0.40
codegen_flags: <defaults>
</compile_context>

<pallas_src>
import functools

import jax
import jax.numpy as jnp
from jax.experimental import pallas as pl
from jax.experimental.pallas import tpu as pltpu


def _round_up(a, b):
    return ((a + b - 1) // b) * b


def _pattern_detector_kernel(w_ref, x_ref, y_ref, m_ref, *,
                             activation, unroll_channels, nchannels):
    """One grid step processes a block of Bn batch rows.

    w_ref : SMEM f32[C]        (unrolled path)  or  VMEM f32[C, 1] (large-C path)
    x_ref : VMEM [Bn, C, HW]   input block in its native dtype (f32 / bf16)
    y_ref : VMEM f32[Bn, HW]   channel-wise-softmax'ed detection map
    m_ref : VMEM f32[Bn, 1]    per-row spatial max (confidence computed in wrapper)
    """
    if unroll_channels:
        # Channel-weighted accumulation with SMEM scalar weights: keeps the
        # largest live temp at Bn*HW (not Bn*C*HW) and stays on cheap VALU
        # mul/add instead of an XLU sublane reduce.
        acc = x_ref[:, 0, :].astype(jnp.float32) * w_ref[0]
        for c in range(1, nchannels):
            acc = acc + x_ref[:, c, :].astype(jnp.float32) * w_ref[c]
        y = acc                                         # (Bn, HW) f32
    else:
        # Large-C fallback: broadcast multiply + sublane reduction.
        x = x_ref[...].astype(jnp.float32)              # (Bn, C, HW)
        w = w_ref[...]                                  # (C, 1)
        y = jnp.sum(x * w[None, :, :], axis=1)          # (Bn, HW)

    # Optional activation (compile-time branch).
    if activation == "relu":
        y = jnp.maximum(y, 0.0)
    elif activation == "sigmoid":
        y = jax.nn.sigmoid(y)
    elif activation == "tanh":
        y = jnp.tanh(y)

    # One cross-lane max per row, reused for the softmax shift and exported so
    # the confidence sigmoid (constant 1.0 when uncalibrated) runs outside.
    m = jnp.max(y, axis=-1, keepdims=True)              # (Bn, 1)

    # Channel-wise softmax over the spatial axis of the single channel:
    # one reciprocal per row + HW multiplies instead of HW divides.
    e = jnp.exp(y - m)                                  # EUP
    denom = jnp.sum(e, axis=-1, keepdims=True)          # (Bn, 1)
    y_ref[...] = (e * pl.reciprocal(denom, approx=False)).astype(y_ref.dtype)
    m_ref[...] = m.astype(m_ref.dtype)


def pattern_detector_forward(x_nchw, conv_weight, mean, std, activation=None):
    """Pallas implementation of PatternDetector.forward.

    x_nchw      : (N, C, H, W) float32 or bfloat16
    conv_weight : (1, C, 1, 1) (Conv2d weight, bias=False)
    mean, std   : floats (ConfidenceMeasure parameters; defaults -inf, 1.0)
    Returns (x_norm, c) with shapes (N, 1, H, W) float32 and (N, 1) float32.
    """
    N, C, H, W = x_nchw.shape
    HW = H * W

    # Keep the input in its native dtype in HBM (no wrapper upcast).
    x = x_nchw.reshape(N, C, HW)
    in_itemsize = jnp.dtype(x.dtype).itemsize

    unroll_channels = C <= 32
    if unroll_channels:
        w = conv_weight.reshape(C).astype(jnp.float32)
        w_spec = pl.BlockSpec(memory_space=pltpu.SMEM)
    else:
        w = conv_weight.reshape(C, 1).astype(jnp.float32)
        w_spec = pl.BlockSpec((C, 1), lambda i: (0, 0))

    # ---- per-generation VMEM budget ----------------------------------------
    try:
        info = pltpu.get_tpu_info()
        vmem_cap = int(getattr(info, "vmem_capacity_bytes", 0)) or (64 << 20)
    except Exception:
        vmem_cap = 64 << 20                    # safe floor on every generation
    vmem_budget = (vmem_cap * 5) // 8          # ~80 MiB on 128 MiB parts, ~40 MiB on v7x
    vmem_limit = min(vmem_cap - (2 << 20), vmem_budget + (16 << 20))
    target_block_bytes = 8 << 20               # ~8 MiB per x DMA

    # ---- batch blocking ------------------------------------------------------
    in_sub = max(8, 32 // in_itemsize)         # sublane packing of the input dtype
    C_pad = _round_up(C, in_sub)
    HW_pad = _round_up(HW, 128)

    def footprint(bn):
        bn8 = _round_up(bn, 8)
        x_blk = bn * C_pad * HW_pad * in_itemsize        # sublane-padded x tile
        y_blk = bn8 * HW_pad * 4
        m_blk = bn8 * 128 * 4
        total = 2 * (x_blk + y_blk + m_blk)              # double-buffered pipelines
        total += 4 * bn8 * HW_pad * 4                    # in-kernel f32 temps (acc/exp/...)
        if not unroll_channels:
            total += bn * C_pad * HW_pad * 4             # materialized x*w product
        return total

    # Legal block sizes: N itself, or any multiple of 8 below N (ragged final
    # block handled by Pallas padded reads / masked writes; no jnp.pad of x).
    legal = [N] + list(range(((N - 1) // 8) * 8, 7, -8))
    legal = [b for b in dict.fromkeys(legal) if b >= 1]

    x_row_bytes = C * HW * in_itemsize
    want = max(1, target_block_bytes // max(x_row_bytes, 1))
    if N >= 16:
        # Guarantee >= 2 grid steps so both v7x TensorCores get work under
        # dimension_semantics=("parallel",); near-zero cost on 1-core parts.
        want = min(want, (N + 1) // 2)

    candidates = [b for b in legal if b <= want] or [legal[-1]]
    Bn = candidates[-1]
    for b in candidates:                       # candidates are descending
        if footprint(b) <= vmem_budget:
            Bn = b
            break
    if footprint(Bn) > vmem_budget:
        # TODO(synk): very large C*HW feature maps would want an HW-tiled
        # online-softmax variant; for now just raise the VMEM limit.
        vmem_limit = min(vmem_cap - (2 << 20), footprint(Bn) + (8 << 20))

    grid = pl.cdiv(N, Bn)

    kernel = functools.partial(
        _pattern_detector_kernel,
        activation=activation,
        unroll_channels=unroll_channels,
        nchannels=C,
    )

    y, m = pl.pallas_call(
        kernel,
        out_shape=(
            jax.ShapeDtypeStruct((N, HW), jnp.float32),
            jax.ShapeDtypeStruct((N, 1), jnp.float32),
        ),
        grid_spec=pltpu.PrefetchScalarGridSpec(
            num_scalar_prefetch=0,
            grid=(grid,),
            in_specs=[
                w_spec,                                            # conv weight
                pl.BlockSpec((Bn, C, HW), lambda i: (i, 0, 0)),    # x batch block
            ],
            out_specs=[
                pl.BlockSpec((Bn, HW), lambda i: (i, 0)),          # softmax map (lane-dense)
                pl.BlockSpec((Bn, 1), lambda i: (i, 0)),           # per-row max
            ],
        ),
        compiler_params=pltpu.CompilerParams(
            dimension_semantics=("parallel",),   # distinct output blocks per step
            vmem_limit_bytes=int(vmem_limit),
        ),
    )(w, x)

    # Confidence on a tiny (N, 1) array in the wrapper: reproduces the
    # reference sub-then-div exactly (mean=-inf -> sigmoid(+inf) = 1.0) and
    # keeps the kernel's EUP budget for exp() only.
    conf = jax.nn.sigmoid((m - mean) / std)
    return y.reshape(N, 1, H, W), conf


def _reference_forward(x_nchw, conv_weight, mean, std, activation=None):
    """Plain-JAX reference mirroring the PyTorch module."""
    w = conv_weight.reshape(-1).astype(jnp.float32)              # (C,)
    y = jnp.einsum("nchw,c->nhw", x_nchw.astype(jnp.float32), w)[:, None]
    if activation == "relu":
        y = jnp.maximum(y, 0.0)
    elif activation == "sigmoid":
        y = jax.nn.sigmoid(y)
    elif activation == "tanh":
        y = jnp.tanh(y)
    vmax = jnp.max(y, axis=(2, 3))                               # (N, 1)
    c = jax.nn.sigmoid((vmax - mean) / std)
    flat = y.reshape(y.shape[0], 1, -1)
    sm = jax.nn.softmax(flat, axis=2).reshape(y.shape)
    return sm, c


if __name__ == "__main__":
    N, C, H, W = 2, 4, 16, 16

    key = jax.random.PRNGKey(0)
    kx, kw = jax.random.split(key)

    x = jax.random.normal(kx, (N, C, H, W), dtype=jnp.float32)

    # Deterministic xavier_normal_ init for Conv2d(C -> 1, kernel 1x1, bias=False):
    # std = gain * sqrt(2 / (fan_in + fan_out)), fan_in = C, fan_out = 1, gain = 1.
    xavier_std = (2.0 / (C + 1)) ** 0.5
    conv_weight = xavier_std * jax.random.normal(kw, (1, C, 1, 1), dtype=jnp.float32)

    # ConfidenceMeasure defaults (uncalibrated): mean = -inf, std = 1.0
    # => confidence is sigmoid(+inf) = 1.0, matching the PyTorch module.
    mean, std = -float("inf"), 1.0

    y, c = pattern_detector_forward(x, conv_weight, mean, std, activation=None)
    jax.block_until_ready((y, c))

    y_ref, c_ref = _reference_forward(x, conv_weight, mean, std, activation=None)

    assert y.shape == (N, 1, H, W) and c.shape == (N, 1)
    assert jnp.allclose(y, y_ref, atol=1e-5, rtol=1e-5)
    assert jnp.allclose(c, c_ref, atol=1e-5, rtol=1e-5)

    print("KERNEL_OK")
</pallas_src>

<mosaic_0001>
module attributes {stable_mosaic.version = 11 : i64} {
  func.func @_pattern_detector_kernel(%arg0: i32, %arg1: memref<4xf32, #tpu.memory_space<smem>>, %arg2: memref<2x4x256xf32, #tpu.memory_space<vmem>>, %arg3: memref<2x256xf32, #tpu.memory_space<vmem>>, %arg4: memref<2x1xf32, #tpu.memory_space<vmem>>) attributes {dimension_semantics = [#tpu.dimension_semantics<parallel>], iteration_bounds = array<i64: 1>, scalar_prefetch = 0 : i64, scratch_operands = 0 : i64, tpu.core_type = #tpu.core_type<tc>, window_params = [{transform_indices = @transform_0, window_bounds = array<i64: 4>}, {transform_indices = @transform_1, window_bounds = array<i64: 2, 4, 256>}, {transform_indices = @transform_2, window_bounds = array<i64: 2, 256>}, {transform_indices = @transform_3, window_bounds = array<i64: 2, 1>}]} {
    %c0 = arith.constant 0 : index
    %c0_0 = arith.constant 0 : index
    %c0_1 = arith.constant 0 : index
    %0 = vector.load %arg2[%c0, %c0_0, %c0_1] : memref<2x4x256xf32, #tpu.memory_space<vmem>>, vector<2x1x256xf32>
    %1 = vector.shape_cast %0 : vector<2x1x256xf32> to vector<2x256xf32>
    %c0_2 = arith.constant 0 : index
    %2 = memref.load %arg1[%c0_2] : memref<4xf32, #tpu.memory_space<smem>>
    %3 = vector.broadcast %2 : f32 to vector<2x256xf32>
    %4 = arith.mulf %1, %3 : vector<2x256xf32>
    %c0_3 = arith.constant 0 : index
    %c1 = arith.constant 1 : index
    %c0_4 = arith.constant 0 : index
    %5 = vector.load %arg2[%c0_3, %c1, %c0_4] : memref<2x4x256xf32, #tpu.memory_space<vmem>>, vector<2x1x256xf32>
    %6 = vector.shape_cast %5 : vector<2x1x256xf32> to vector<2x256xf32>
    %c1_5 = arith.constant 1 : index
    %7 = memref.load %arg1[%c1_5] : memref<4xf32, #tpu.memory_space<smem>>
    %8 = vector.broadcast %7 : f32 to vector<2x256xf32>
    %9 = arith.mulf %6, %8 : vector<2x256xf32>
    %10 = arith.addf %4, %9 : vector<2x256xf32>
    %c0_6 = arith.constant 0 : index
    %c2 = arith.constant 2 : index
    %c0_7 = arith.constant 0 : index
    %11 = vector.load %arg2[%c0_6, %c2, %c0_7] : memref<2x4x256xf32, #tpu.memory_space<vmem>>, vector<2x1x256xf32>
    %12 = vector.shape_cast %11 : vector<2x1x256xf32> to vector<2x256xf32>
    %c2_8 = arith.constant 2 : index
    %13 = memref.load %arg1[%c2_8] : memref<4xf32, #tpu.memory_space<smem>>
    %14 = vector.broadcast %13 : f32 to vector<2x256xf32>
    %15 = arith.mulf %12, %14 : vector<2x256xf32>
    %16 = arith.addf %10, %15 : vector<2x256xf32>
    %c0_9 = arith.constant 0 : index
    %c3 = arith.constant 3 : index
    %c0_10 = arith.constant 0 : index
    %17 = vector.load %arg2[%c0_9, %c3, %c0_10] : memref<2x4x256xf32, #tpu.memory_space<vmem>>, vector<2x1x256xf32>
    %18 = vector.shape_cast %17 : vector<2x1x256xf32> to vector<2x256xf32>
    %c3_11 = arith.constant 3 : index
    %19 = memref.load %arg1[%c3_11] : memref<4xf32, #tpu.memory_space<smem>>
    %20 = vector.broadcast %19 : f32 to vector<2x256xf32>
    %21 = arith.mulf %18, %20 : vector<2x256xf32>
    %22 = arith.addf %16, %21 : vector<2x256xf32>
    %cst = arith.constant dense<0xFF800000> : vector<2xf32>
    %23 = vector.multi_reduction <maximumf>, %22, %cst [1] : vector<2x256xf32> to vector<2xf32>
    %24 = vector.shape_cast %23 : vector<2xf32> to vector<2x1xf32>
    %25 = vector.broadcast %24 : vector<2x1xf32> to vector<2x256xf32>
    %26 = arith.subf %22, %25 : vector<2x256xf32>
    %27 = math.exp %26 : vector<2x256xf32>
    %cst_12 = arith.constant dense<0.000000e+00> : vector<2xf32>
    %28 = vector.multi_reduction <add>, %27, %cst_12 [1] : vector<2x256xf32> to vector<2xf32>
    %29 = vector.shape_cast %28 : vector<2xf32> to vector<2x1xf32>
    %30 = tpu.reciprocal %29 : vector<2x1xf32> -> vector<2x1xf32>
    %31 = vector.broadcast %30 : vector<2x1xf32> to vector<2x256xf32>
    %32 = arith.mulf %27, %31 : vector<2x256xf32>
    %c0_13 = arith.constant 0 : index
    %c0_14 = arith.constant 0 : index
    %33 = vector.load %arg3[%c0_13, %c0_14] : memref<2x256xf32, #tpu.memory_space<vmem>>, vector<2x256xf32>
    tpu.vector_store %arg3[%c0_13, %c0_14], %32 {strides = array<i32>} : memref<2x256xf32, #tpu.memory_space<vmem>>, vector<2x256xf32>,
    %c0_15 = arith.constant 0 : index
    %c0_16 = arith.constant 0 : index
    %34 = vector.load %arg4[%c0_15, %c0_16] : memref<2x1xf32, #tpu.memory_space<vmem>>, vector<2x1xf32>
    tpu.vector_store %arg4[%c0_15, %c0_16], %24 {strides = array<i32>} : memref<2x1xf32, #tpu.memory_space<vmem>>, vector<2x1xf32>,
    return
  }
  func.func @transform_0(%arg0: i32) -> i32 {
    %c0_i32 = arith.constant 0 : i32
    %c0_i32_0 = arith.constant 0 : i32
    return %c0_i32 : i32
  }
  func.func @transform_1(%arg0: i32) -> (i32, i32, i32) {
    %c0_i32 = arith.constant 0 : i32
    %c0_i32_0 = arith.constant 0 : i32
    %c0_i32_1 = arith.constant 0 : i32
    return %arg0, %c0_i32, %c0_i32_0 : i32, i32, i32
  }
  func.func @transform_2(%arg0: i32) -> (i32, i32) {
    %c0_i32 = arith.constant 0 : i32
    %c0_i32_0 = arith.constant 0 : i32
    return %arg0, %c0_i32 : i32, i32
  }
  func.func @transform_3(%arg0: i32) -> (i32, i32) {
    %c0_i32 = arith.constant 0 : i32
    %c0_i32_0 = arith.constant 0 : i32
    return %arg0, %c0_i32 : i32, i32
  }
}

</mosaic_0001>

<llo_original>
// kernel: tpu_custom_call.1
$region0: #{tpu_custom_call.1}
  #allocation0 [shape = 'u32[]', space=smem, size = 0x4, offset = 0x4, fixed_abs, tag = 'smem constant byte address 0x4 - core index']
  #allocation1 [shape = 'u32[144,128]{1,0:T(1,128)}', space=vmem, size = 0x12000, scoped, tag = 'internal scratch']
  %s0 = inlined_call_operand.hbm [shape: f32[4], index: 0, kind: input, shape index: {}]
  %s1 = inlined_call_operand.hbm [shape: f32[2,4,256], index: 1, kind: input, shape index: {}]
  %s2 = inlined_call_operand.hbm [shape: f32[2,256], index: 2, kind: output, shape index: {0}]
  %s3 = inlined_call_operand.vmem [shape: f32[2,1], index: 3, kind: output, shape index: {1}]
  %4 = xla_tuple %s2, %s3
  %s5 = sld [smem:[#allocation0]]
  $region34: #{tpu_custom_call.1} parent=0
    _
  %s7 = ssub.s32 1, %s5
  %s8 = scalar_select 0, %s7, %s5
  $region1: #{tpu_custom_call.1} parent=0
    #allocation2 [shape = 'u8[512]{0}', space=smem, size = 0x200, scoped, tag = 'input window, operand 0, single buffered']
    #allocation3 [shape = 's32[1]{0}', space=sflag, size = 0x4, scoped, tag = 'scoped memory for tpu_custom_call.1']
    #allocation4 [shape = 's32[1]{0}', space=sflag, size = 0x4, scoped, tag = 'scoped memory for tpu_custom_call.1']
    #allocation5 [shape = 's32[1]{0}', space=sflag, size = 0x4, scoped, tag = 'scoped memory for tpu_custom_call.1']
    #allocation6 [shape = 'u8[8192]{0}', space=vmem, size = 0x2000, scoped, tag = 'input window, operand 1, single buffered']
    #allocation7 [shape = 'u8[2048]{0}', space=vmem, size = 0x800, scoped, tag = 'output window, operand 0, single buffered']
    %9 = vsyncpa [#allocation5], 0
    %10 = vsyncpa [#allocation3], 0
    %11 = vsyncpa [#allocation4], 0
    // Predicated region
    $region2: #{tpu_custom_call.1} parent=1 // pred_check
      _
    $region3: #{tpu_custom_call.1} parent=1 // pred_check_branch
      %13 = sbr.rel (0) target = $region5
    $region4: #{tpu_custom_call.1} parent=1 // pred_region
      %s15 = ssub.s32 16, 16
      %16 = vsyncadd [#allocation5], %s15
      %19 = dma.hbm_to_smem %s0, 16, [#allocation2], [#allocation5]
    $region5: #{tpu_custom_call.1} parent=1 // pred_fallthru
      _
    // Predicated region
    $region6: #{tpu_custom_call.1} parent=1 // pred_check
      _
    $region7: #{tpu_custom_call.1} parent=1 // pred_check_branch
      %21 = sbr.rel (0) target = $region9
    $region8: #{tpu_custom_call.1} parent=1 // pred_region
      %s23 = ssub.s32 256, 256
      %24 = vsyncadd [#allocation3], %s23
      %s25 = sshll.u32 [#allocation6], 4
      %s26 = int_to_ptr.vmem [resolvable:$true] %s25
      %31 = dma.hbm_to_vmem [thread:$0]  %s1, 256, %s26, [#allocation3], 128, 128, 8
    $region9: #{tpu_custom_call.1} parent=1 // pred_fallthru
      _
    // Predicated region
    $region10: #{tpu_custom_call.1} parent=1 // pred_check
      _
    $region11: #{tpu_custom_call.1} parent=1 // pred_check_branch
      %33 = sbr.rel (0) target = $region13
    $region12: #{tpu_custom_call.1} parent=1 // pred_region
      %34 = dma.done [#allocation5], 16
    $region13: #{tpu_custom_call.1} parent=1 // pred_fallthru
      _
    // Predicated region
    $region14: #{tpu_custom_call.1} parent=1 // pred_check
      _
    $region15: #{tpu_custom_call.1} parent=1 // pred_check_branch
      %36 = sbr.rel (0) target = $region17
    $region16: #{tpu_custom_call.1} parent=1 // pred_region
      %37 = dma.done [#allocation3], 256
    $region17: #{tpu_custom_call.1} parent=1 // pred_fallthru
      _
    %38 = sfence
    %v39 = vld [vmem:[#allocation6] ss:$4 sm:$0x3]
    %s40 = scalar_lea.vmem [#allocation6], 8
    %v41 = vld [vmem:[%s40] ss:$4 sm:$0x3]
    %s42 = sld [smem:[#allocation2]]
    %v43 = vstv %s42
    %v44 = vmul.f32 %v39, %v43
    %v45 = vmul.f32 %v41, %v43
    %s46 = scalar_lea.vmem [#allocation6], 1
    %v47 = vld [vmem:[%s46] ss:$4 sm:$0x3]
    %s48 = scalar_lea.vmem [#allocation6], 9
    %v49 = vld [vmem:[%s48] ss:$4 sm:$0x3]
    %s50 = sld [smem:[#allocation2 + $0x1]]
    %v51 = vstv %s50
    %v52 = vmul.f32 %v47, %v51
    %v53 = vmul.f32 %v49, %v51
    %v54 = vadd.f32 %v44, %v52
    %v55 = vadd.f32 %v45, %v53
    %s56 = scalar_lea.vmem [#allocation6], 2
    %v57 = vld [vmem:[%s56] ss:$4 sm:$0x3]
    %s58 = scalar_lea.vmem [#allocation6], 10
    %v59 = vld [vmem:[%s58] ss:$4 sm:$0x3]
    %s60 = sld [smem:[#allocation2 + $0x2]]
    %v61 = vstv %s60
    %v62 = vmul.f32 %v57, %v61
    %v63 = vmul.f32 %v59, %v61
    %v64 = vadd.f32 %v54, %v62
    %v65 = vadd.f32 %v55, %v63
    %s66 = scalar_lea.vmem [#allocation6], 3
    %v67 = vld [vmem:[%s66] ss:$4 sm:$0x3]
    %s68 = scalar_lea.vmem [#allocation6], 11
    %v69 = vld [vmem:[%s68] ss:$4 sm:$0x3]
    %s70 = sld [smem:[#allocation2 + $0x3]]
    %v71 = vstv %s70
    %v72 = vmul.f32 %v67, %v71
    %v73 = vmul.f32 %v69, %v71
    %v74 = vadd.f32 %v64, %v72
    %v75 = vadd.f32 %v65, %v73
    %v78 = vcombine.low %v74, %v75
    %v80 = vunpack.c.l.s4 1966171168
    %v81 = vunpack.c.0.s8 %v80
    %v82 = vlaneseq
    %v83 = vshrl.u32 %v82, 7
    %v84 = vsub.s32 %v81, %v83
    %v85 = vrot.slane %v78, %v84
    %v86 = vcombine.high %v85, %v85
    %v88 = vunpack.c.l.s4 1966171168
    %v89 = vunpack.c.0.s8 %v88
    %v90 = vlaneseq
    %v91 = vshrl.u32 %v90, 7
    %v92 = vsub.s32 %v89, %v91
    %v93 = vrot.slane %v85, %v92
    %v95 = vunpack.c.l.s4 1966171168
    %v96 = vunpack.c.0.s8 %v95
    %v97 = vlaneseq
    %v98 = vshrl.u32 %v97, 7
    %v99 = vsub.s32 %v96, %v98
    %v100 = vrot.slane %v86, %v99
    %vm103 = vcmask 1041408
    %v104 = vsel %vm103, %v93, -inf
    %v105 = vsel %vm103, %v100, -inf
    %v106 = vmax.f32 %v104, %v105
    %107 = vmax.xlane.f32.xlu0 %v106
    %v108 = vpop.xlane.xlu0 %107
    %v110 = vlaneseq
    %v111 = vshrl.u32 %v110, 7
    %v112 = vsub.s32 0, %v111
    %v113 = vrot.slane %v108, %v112
    %v114 = vlaneseq
    %v115 = vshrl.u32 %v114, 7
    %v116 = vsub.s32 1, %v115
    %v117 = vrot.slane %v108, %v116
    %v120 = vsub.f32 %v74, %v113
    %v121 = vsub.f32 %v75, %v117
    %v122 = vmul.f32 %v120, 1.442695
    %v123 = vpow.pop %v122
    %v124 = vmul.f32 %v121, 1.442695
    %v125 = vpow.pop %v124
    %v128 = vcombine.low %v123, %v125
    %v130 = vunpack.c.l.s4 1966171168
    %v131 = vunpack.c.0.s8 %v130
    %v132 = vlaneseq
    %v133 = vshrl.u32 %v132, 7
    %v134 = vsub.s32 %v131, %v133
    %v135 = vrot.slane %v128, %v134
    %v136 = vcombine.high %v135, %v135
    %v138 = vunpack.c.l.s4 1966171168
    %v139 = vunpack.c.0.s8 %v138
    %v140 = vlaneseq
    %v141 = vshrl.u32 %v140, 7
    %v142 = vsub.s32 %v139, %v141
    %v143 = vrot.slane %v135, %v142
    %v145 = vunpack.c.l.s4 1966171168
    %v146 = vunpack.c.0.s8 %v145
    %v147 = vlaneseq
    %v148 = vshrl.u32 %v147, 7
    %v149 = vsub.s32 %v146, %v148
    %v150 = vrot.slane %v136, %v149
    %v153 = vsel %vm103, %v143, 0.0
    %v154 = vsel %vm103, %v150, 0.0
    %v155 = vadd.f32 %v153, %v154
    %156 = vadd.xlane.f32.xlu0 %v155
    %v157 = vpop.xlane.xlu0 %156
    %v158 = vrcp.pop %v157
    %v160 = vlaneseq
    %v161 = vshrl.u32 %v160, 7
    %v162 = vsub.s32 0, %v161
    %v163 = vrot.slane %v158, %v162
    %v164 = vlaneseq
    %v165 = vshrl.u32 %v164, 7
    %v166 = vsub.s32 1, %v165
    %v167 = vrot.slane %v158, %v166
    %v170 = vmul.f32 %v123, %v163
    %v171 = vmul.f32 %v125, %v167
    %v174 = vcombine.low %v170, %v171
    %v176 = vunpack.c.l.s4 1935823168
    %v177 = vunpack.c.0.s8 %v176
    %v178 = vlaneseq
    %v179 = vshrl.u32 %v178, 7
    %v180 = vsub.s32 %v177, %v179
    %v181 = vrot.slane %v174, %v180
    %183 = vst [vmem:[#allocation7] sm:$0xf] %v181
    %vm184 = vcmask 1024
    %185 = vst.msk [vmem:[%s3] sm:$0x3] %vm184, %v108
    // Predicated region
    $region18: #{tpu_custom_call.1} parent=1 // pred_check
      _
    $region19: #{tpu_custom_call.1} parent=1 // pred_check_branch
      %187 = sbr.rel (0) target = $region21
    $region20: #{tpu_custom_call.1} parent=1 // pred_region
      %s189 = ssub.s32 64, 64
      %190 = vsyncadd [#allocation4], %s189
      %s192 = sshll.u32 [#allocation7], 4
      %s193 = int_to_ptr.vmem [resolvable:$true] %s192
      %195 = dma.vmem_to_hbm [thread:$0]  %s193, 64, %s2, [#allocation4]
    $region21: #{tpu_custom_call.1} parent=1 // pred_fallthru
      _
    // Predicated region
    $region22: #{tpu_custom_call.1} parent=1 // pred_check
      _
    $region23: #{tpu_custom_call.1} parent=1 // pred_check_branch
      %197 = sbr.rel (0) target = $region25
    $region24: #{tpu_custom_call.1} parent=1 // pred_region
      _
    $region25: #{tpu_custom_call.1} parent=1 // pred_fallthru
      _
    // Predicated region
    $region26: #{tpu_custom_call.1} parent=1 // pred_check
      _
    $region27: #{tpu_custom_call.1} parent=1 // pred_check_branch
      %199 = sbr.rel (0) target = $region29
    $region28: #{tpu_custom_call.1} parent=1 // pred_region
      %200 = dma.done [#allocation4], 64
    $region29: #{tpu_custom_call.1} parent=1 // pred_fallthru
      _
    // Predicated region
    $region30: #{tpu_custom_call.1} parent=1 // pred_check
      _
    $region31: #{tpu_custom_call.1} parent=1 // pred_check_branch
      %202 = sbr.rel (0) target = $region33
    $region32: #{tpu_custom_call.1} parent=1 // pred_region
      _
    $region33: #{tpu_custom_call.1} parent=1 // pred_fallthru
      _
    %203 = vsyncpa [#allocation3], 1
    %204 = vsyncpa [#allocation4], 1
    %205 = vsyncpa [#allocation5], 1

</llo_original>
